<compile_context>
chip_gen: v7x
topology: tpu7x:2x2x1
jax: 0.10.0
libtpu: 0.0.40
codegen_flags: <defaults>
</compile_context>

<pallas_src>
import jax
import jax.numpy as jnp
from jax.experimental import pallas as pl
from jax.experimental.pallas import tpu as pltpu


def _round_up(x, m):
    return ((x + m - 1) // m) * m


def homefield_kernel(adv_ref, skill_ref, loc_ref, out_ref):
    # adv_ref: SMEM scalar (shape (1,)); skill_ref/loc_ref/out_ref: VMEM tiles.
    adv = adv_ref[0]
    out_ref[...] = skill_ref[...] + adv * loc_ref[...].astype(jnp.float32)


def home_field(skill, loc, advantage, *, block_rows=512, block_cols=1024):
    """skill: f32[R, C], loc: 0/1 indicator [R, C] (any int/bool dtype),
    advantage: f32 scalar parameter."""
    R, C = skill.shape
    skill = skill.astype(jnp.float32)
    # loc is a home-field indicator -> int8 is lossless and 4x cheaper on HBM.
    loc_i8 = loc.astype(jnp.int8)
    adv = jnp.asarray(advantage, jnp.float32).reshape((1,))

    # int8 min tile is (32, 128) (f32 is (8, 128)); keep blocks 32x128-aligned
    # and clamp to the (padded) array extent so tiny inputs don't over-allocate.
    br = min(block_rows, _round_up(R, 32))
    bc = min(block_cols, _round_up(C, 128))

    grid = (pl.cdiv(R, br), pl.cdiv(C, bc))

    # Double-buffered working set: skill(f32) + loc(i8) + out(f32) blocks,
    # plus a little headroom. Capped well under every generation's VMEM.
    vmem_bytes = 2 * br * bc * (4 + 1 + 4) + (2 << 20)
    vmem_bytes = int(min(vmem_bytes, 48 << 20))

    return pl.pallas_call(
        homefield_kernel,
        out_shape=jax.ShapeDtypeStruct((R, C), jnp.float32),
        grid=grid,
        in_specs=[
            pl.BlockSpec(memory_space=pltpu.SMEM),            # advantage scalar
            pl.BlockSpec((br, bc), lambda i, j: (i, j)),      # skill tile (f32)
            pl.BlockSpec((br, bc), lambda i, j: (i, j)),      # loc tile (int8)
        ],
        out_specs=pl.BlockSpec((br, bc), lambda i, j: (i, j)),
        compiler_params=pltpu.CompilerParams(
            dimension_semantics=("parallel", "parallel"),
            vmem_limit_bytes=vmem_bytes,
        ),
    )(adv, skill, loc_i8)


if __name__ == "__main__":
    key = jax.random.PRNGKey(0)
    k1, k2 = jax.random.split(key)

    # Small, deliberately non-divisible shapes to exercise the cdiv/ragged path.
    R, C = 48, 384
    skill = jax.random.normal(k1, (R, C), dtype=jnp.float32)
    loc = jax.random.bernoulli(k2, 0.5, (R, C)).astype(jnp.int32)

    # Deterministic parameter init, matching nn.Parameter(torch.tensor(1.0)).
    advantage = jnp.float32(1.0)

    ref = skill + advantage * loc.astype(jnp.float32)

    # 1) Default (large-block) configuration: blocks clamp to padded extent.
    out = home_field(skill, loc, advantage)
    out = jax.block_until_ready(out)
    assert jnp.allclose(out, ref, atol=1e-6), "mismatch vs reference (default blocks)"

    # 2) Small blocks to exercise a >1x>1 grid plus a ragged row edge.
    out_small = home_field(skill, loc, advantage, block_rows=32, block_cols=128)
    out_small = jax.block_until_ready(out_small)
    assert jnp.allclose(out_small, ref, atol=1e-6), "mismatch vs reference (small blocks)"

    print("KERNEL_OK")
</pallas_src>

<mosaic_0001>
module attributes {stable_mosaic.version = 11 : i64} {
  func.func @homefield_kernel(%arg0: i32, %arg1: i32, %arg2: memref<1xf32, #tpu.memory_space<smem>>, %arg3: memref<64x384xf32, #tpu.memory_space<vmem>>, %arg4: memref<64x384xi8, #tpu.memory_space<vmem>>, %arg5: memref<64x384xf32, #tpu.memory_space<vmem>>) attributes {dimension_semantics = [#tpu.dimension_semantics<parallel>, #tpu.dimension_semantics<parallel>], iteration_bounds = array<i64: 1, 1>, scalar_prefetch = 0 : i64, scratch_operands = 0 : i64, tpu.core_type = #tpu.core_type<tc>, window_params = [{transform_indices = @transform_0, window_bounds = array<i64: 1>}, {transform_indices = @transform_1, window_bounds = array<i64: 64, 384>}, {transform_indices = @transform_2, window_bounds = array<i64: 64, 384>}, {transform_indices = @transform_3, window_bounds = array<i64: 64, 384>}]} {
    %c0 = arith.constant 0 : index
    %0 = memref.load %arg2[%c0] : memref<1xf32, #tpu.memory_space<smem>>
    %c0_0 = arith.constant 0 : index
    %c0_1 = arith.constant 0 : index
    %1 = vector.load %arg3[%c0_0, %c0_1] : memref<64x384xf32, #tpu.memory_space<vmem>>, vector<64x384xf32>
    %c0_2 = arith.constant 0 : index
    %c0_3 = arith.constant 0 : index
    %2 = vector.load %arg4[%c0_2, %c0_3] : memref<64x384xi8, #tpu.memory_space<vmem>>, vector<64x384xi8>
    %3 = arith.sitofp %2 : vector<64x384xi8> to vector<64x384xf32>
    %4 = vector.broadcast %0 : f32 to vector<64x384xf32>
    %5 = arith.mulf %4, %3 : vector<64x384xf32>
    %6 = arith.addf %1, %5 : vector<64x384xf32>
    %c0_4 = arith.constant 0 : index
    %c0_5 = arith.constant 0 : index
    %7 = vector.load %arg5[%c0_4, %c0_5] : memref<64x384xf32, #tpu.memory_space<vmem>>, vector<64x384xf32>
    tpu.vector_store %arg5[%c0_4, %c0_5], %6 {strides = array<i32>} : memref<64x384xf32, #tpu.memory_space<vmem>>, vector<64x384xf32>,
    return
  }
  func.func @transform_0(%arg0: i32, %arg1: i32) -> i32 {
    %c0_i32 = arith.constant 0 : i32
    %c0_i32_0 = arith.constant 0 : i32
    return %c0_i32 : i32
  }
  func.func @transform_1(%arg0: i32, %arg1: i32) -> (i32, i32) {
    %c0_i32 = arith.constant 0 : i32
    return %arg0, %arg1 : i32, i32
  }
  func.func @transform_2(%arg0: i32, %arg1: i32) -> (i32, i32) {
    %c0_i32 = arith.constant 0 : i32
    return %arg0, %arg1 : i32, i32
  }
  func.func @transform_3(%arg0: i32, %arg1: i32) -> (i32, i32) {
    %c0_i32 = arith.constant 0 : i32
    return %arg0, %arg1 : i32, i32
  }
}

</mosaic_0001>

<llo_original>
// kernel: tpu_custom_call.1
$region0: #{tpu_custom_call.1}
  #allocation0 [shape = 'u32[]', space=smem, size = 0x4, offset = 0x4, fixed_abs, tag = 'smem constant byte address 0x4 - core index']
  #allocation1 [shape = 'u32[144,128]{1,0:T(1,128)}', space=vmem, size = 0x12000, scoped, tag = 'internal scratch']
  #allocation2 [shape = 'f32[1]{0:T(128)S(6)}', space=smem, size = 0x200, scoped, tag = 'scoped memory for tpu_custom_call.1']
  %s0 = inlined_call_operand.<no memory space> [shape: f32[1], index: 0, kind: input, shape index: {}]
  %s1 = inlined_call_operand.hbm [shape: f32[48,384], index: 1, kind: input, shape index: {}]
  %s2 = inlined_call_operand.hbm [shape: s8[48,384], index: 2, kind: input, shape index: {}]
  %s3 = inlined_call_operand.hbm [shape: f32[48,384], index: 3, kind: output, shape index: {}]
  %s4 = sld [smem:[#allocation0]]
  $region30: #{tpu_custom_call.1} parent=0
    _
  %s6 = ssub.s32 1, %s4
  %s7 = scalar_select 0, %s6, %s4
  %8 = sst [smem:[#allocation2]] %s0
  $region1: #{tpu_custom_call.1} parent=0
    #allocation3 [shape = 'u8[98304]{0}', space=vmem, size = 0x18000, scoped, tag = 'input window, operand 1, single buffered']
    #allocation4 [shape = 's32[1]{0}', space=sflag, size = 0x4, scoped, tag = 'scoped memory for tpu_custom_call.1']
    #allocation5 [shape = 's32[1]{0}', space=sflag, size = 0x4, scoped, tag = 'scoped memory for tpu_custom_call.1']
    #allocation6 [shape = 'u8[24576]{0}', space=vmem, size = 0x6000, scoped, tag = 'input window, operand 2, single buffered']
    #allocation7 [shape = 's32[1]{0}', space=sflag, size = 0x4, scoped, tag = 'scoped memory for tpu_custom_call.1']
    #allocation8 [shape = 'u8[98304]{0}', space=vmem, size = 0x18000, scoped, tag = 'output window, operand 0, single buffered']
    %9 = vsyncpa [#allocation4], 0
    %10 = vsyncpa [#allocation7], 0
    %11 = vsyncpa [#allocation5], 0
    // Predicated region
    $region2: #{tpu_custom_call.1} parent=1 // pred_check
      _
    $region3: #{tpu_custom_call.1} parent=1 // pred_check_branch
      %13 = sbr.rel (0) target = $region5
    $region4: #{tpu_custom_call.1} parent=1 // pred_region
      _
    $region5: #{tpu_custom_call.1} parent=1 // pred_fallthru
      _
    // Predicated region
    $region6: #{tpu_custom_call.1} parent=1 // pred_check
      _
    $region7: #{tpu_custom_call.1} parent=1 // pred_check_branch
      %15 = sbr.rel (0) target = $region9
    $region8: #{tpu_custom_call.1} parent=1 // pred_region
      %s17 = ssub.s32 3072, 2304
      %18 = vsyncadd [#allocation4], %s17
      %s19 = sshll.u32 [#allocation3], 4
      %s20 = int_to_ptr.vmem [resolvable:$true] %s19
      %25 = dma.hbm_to_vmem [thread:$0]  %s1, 2304, %s20, [#allocation4], 384, 384, 24
    $region9: #{tpu_custom_call.1} parent=1 // pred_fallthru
      _
    // Predicated region
    $region10: #{tpu_custom_call.1} parent=1 // pred_check
      _
    $region11: #{tpu_custom_call.1} parent=1 // pred_check_branch
      %27 = sbr.rel (0) target = $region13
    $region12: #{tpu_custom_call.1} parent=1 // pred_region
      %s29 = ssub.s32 768, 576
      %30 = vsyncadd [#allocation7], %s29
      %s31 = sshll.u32 [#allocation6], 4
      %s32 = int_to_ptr.vmem [resolvable:$true] %s31
      %37 = dma.hbm_to_vmem [thread:$0]  %s2, 576, %s32, [#allocation7], 96, 96, 6
    $region13: #{tpu_custom_call.1} parent=1 // pred_fallthru
      _
    // Predicated region
    $region14: #{tpu_custom_call.1} parent=1 // pred_check
      _
    $region15: #{tpu_custom_call.1} parent=1 // pred_check_branch
      %39 = sbr.rel (0) target = $region17
    $region16: #{tpu_custom_call.1} parent=1 // pred_region
      %40 = dma.done [#allocation4], 3072
    $region17: #{tpu_custom_call.1} parent=1 // pred_fallthru
      _
    // Predicated region
    $region18: #{tpu_custom_call.1} parent=1 // pred_check
      _
    $region19: #{tpu_custom_call.1} parent=1 // pred_check_branch
      %42 = sbr.rel (0) target = $region21
    $region20: #{tpu_custom_call.1} parent=1 // pred_region
      %43 = dma.done [#allocation7], 768
    $region21: #{tpu_custom_call.1} parent=1 // pred_fallthru
      _
    %s44 = sld [smem:[#allocation2]]
    %v45 = vld [vmem:[#allocation3] sm:$0xff]
    %v46 = vld [vmem:[#allocation3 + $0x8] sm:$0xff]
    %v47 = vld [vmem:[#allocation3 + $0x10] sm:$0xff]
    %v48 = vld [vmem:[#allocation3 + $0x18] sm:$0xff]
    %v49 = vld [vmem:[#allocation3 + $0x20] sm:$0xff]
    %v50 = vld [vmem:[#allocation3 + $0x28] sm:$0xff]
    %v51 = vld [vmem:[#allocation3 + $0x30] sm:$0xff]
    %v52 = vld [vmem:[#allocation3 + $0x38] sm:$0xff]
    %v53 = vld [vmem:[#allocation3 + $0x40] sm:$0xff]
    %v54 = vld [vmem:[#allocation3 + $0x48] sm:$0xff]
    %v55 = vld [vmem:[#allocation3 + $0x50] sm:$0xff]
    %v56 = vld [vmem:[#allocation3 + $0x58] sm:$0xff]
    %v57 = vld [vmem:[#allocation3 + $0x60] sm:$0xff]
    %v58 = vld [vmem:[#allocation3 + $0x68] sm:$0xff]
    %v59 = vld [vmem:[#allocation3 + $0x70] sm:$0xff]
    %v60 = vld [vmem:[#allocation3 + $0x78] sm:$0xff]
    %v61 = vld [vmem:[#allocation3 + $0x80] sm:$0xff]
    %v62 = vld [vmem:[#allocation3 + $0x88] sm:$0xff]
    %v63 = vld [vmem:[#allocation3 + $0x90] sm:$0xff]
    %v64 = vld [vmem:[#allocation3 + $0x98] sm:$0xff]
    %v65 = vld [vmem:[#allocation3 + $0xa0] sm:$0xff]
    %v66 = vld [vmem:[#allocation3 + $0xa8] sm:$0xff]
    %v67 = vld [vmem:[#allocation3 + $0xb0] sm:$0xff]
    %v68 = vld [vmem:[#allocation3 + $0xb8] sm:$0xff]
    %v69 = vld [vmem:[#allocation6] sm:$0x3f]
    %v70 = vld [vmem:[#allocation6 + $0x6] sm:$0x3f]
    %v71 = vld [vmem:[#allocation6 + $0xc] sm:$0x3f]
    %v72 = vld [vmem:[#allocation6 + $0x12] sm:$0x3f]
    %v73 = vld [vmem:[#allocation6 + $0x18] sm:$0x3f]
    %v74 = vld [vmem:[#allocation6 + $0x1e] sm:$0x3f]
    %v75 = vld [vmem:[#allocation6 + $0x24] sm:$0x3f]
    %v76 = vld [vmem:[#allocation6 + $0x2a] sm:$0x3f]
    %v77 = vunpack.c.0.s8 %v69
    %v78 = vunpack.c.1.s8 %v69
    %v79 = vunpack.c.2.s8 %v69
    %v80 = vunpack.c.0.s8 %v70
    %v81 = vunpack.c.1.s8 %v70
    %v82 = vunpack.c.2.s8 %v70
    %v83 = vunpack.c.0.s8 %v71
    %v84 = vunpack.c.1.s8 %v71
    %v85 = vunpack.c.2.s8 %v71
    %v86 = vunpack.c.0.s8 %v72
    %v87 = vunpack.c.1.s8 %v72
    %v88 = vunpack.c.2.s8 %v72
    %v89 = vunpack.c.0.s8 %v73
    %v90 = vunpack.c.1.s8 %v73
    %v91 = vunpack.c.2.s8 %v73
    %v92 = vunpack.c.0.s8 %v74
    %v93 = vunpack.c.1.s8 %v74
    %v94 = vunpack.c.2.s8 %v74
    %v95 = vunpack.c.0.s8 %v75
    %v96 = vunpack.c.1.s8 %v75
    %v97 = vunpack.c.2.s8 %v75
    %v98 = vunpack.c.0.s8 %v76
    %v99 = vunpack.c.1.s8 %v76
    %v100 = vunpack.c.2.s8 %v76
    %v101 = vcvt.s32.f32 %v77
    %v102 = vcvt.s32.f32 %v78
    %v103 = vcvt.s32.f32 %v79
    %v104 = vcvt.s32.f32 %v80
    %v105 = vcvt.s32.f32 %v81
    %v106 = vcvt.s32.f32 %v82
    %v107 = vcvt.s32.f32 %v83
    %v108 = vcvt.s32.f32 %v84
    %v109 = vcvt.s32.f32 %v85
    %v110 = vcvt.s32.f32 %v86
    %v111 = vcvt.s32.f32 %v87
    %v112 = vcvt.s32.f32 %v88
    %v113 = vcvt.s32.f32 %v89
    %v114 = vcvt.s32.f32 %v90
    %v115 = vcvt.s32.f32 %v91
    %v116 = vcvt.s32.f32 %v92
    %v117 = vcvt.s32.f32 %v93
    %v118 = vcvt.s32.f32 %v94
    %v119 = vcvt.s32.f32 %v95
    %v120 = vcvt.s32.f32 %v96
    %v121 = vcvt.s32.f32 %v97
    %v122 = vcvt.s32.f32 %v98
    %v123 = vcvt.s32.f32 %v99
    %v124 = vcvt.s32.f32 %v100
    %v125 = vstv %s44
    %v126 = vmul.f32 %v125, %v101
    %v127 = vmul.f32 %v125, %v102
    %v128 = vmul.f32 %v125, %v103
    %v129 = vmul.f32 %v125, %v104
    %v130 = vmul.f32 %v125, %v105
    %v131 = vmul.f32 %v125, %v106
    %v132 = vmul.f32 %v125, %v107
    %v133 = vmul.f32 %v125, %v108
    %v134 = vmul.f32 %v125, %v109
    %v135 = vmul.f32 %v125, %v110
    %v136 = vmul.f32 %v125, %v111
    %v137 = vmul.f32 %v125, %v112
    %v138 = vmul.f32 %v125, %v113
    %v139 = vmul.f32 %v125, %v114
    %v140 = vmul.f32 %v125, %v115
    %v141 = vmul.f32 %v125, %v116
    %v142 = vmul.f32 %v125, %v117
    %v143 = vmul.f32 %v125, %v118
    %v144 = vmul.f32 %v125, %v119
    %v145 = vmul.f32 %v125, %v120
    %v146 = vmul.f32 %v125, %v121
    %v147 = vmul.f32 %v125, %v122
    %v148 = vmul.f32 %v125, %v123
    %v149 = vmul.f32 %v125, %v124
    %v150 = vadd.f32 %v45, %v126
    %v151 = vadd.f32 %v46, %v127
    %v152 = vadd.f32 %v47, %v128
    %v153 = vadd.f32 %v48, %v129
    %v154 = vadd.f32 %v49, %v130
    %v155 = vadd.f32 %v50, %v131
    %v156 = vadd.f32 %v51, %v132
    %v157 = vadd.f32 %v52, %v133
    %v158 = vadd.f32 %v53, %v134
    %v159 = vadd.f32 %v54, %v135
    %v160 = vadd.f32 %v55, %v136
    %v161 = vadd.f32 %v56, %v137
    %v162 = vadd.f32 %v57, %v138
    %v163 = vadd.f32 %v58, %v139
    %v164 = vadd.f32 %v59, %v140
    %v165 = vadd.f32 %v60, %v141
    %v166 = vadd.f32 %v61, %v142
    %v167 = vadd.f32 %v62, %v143
    %v168 = vadd.f32 %v63, %v144
    %v169 = vadd.f32 %v64, %v145
    %v170 = vadd.f32 %v65, %v146
    %v171 = vadd.f32 %v66, %v147
    %v172 = vadd.f32 %v67, %v148
    %v173 = vadd.f32 %v68, %v149
    %174 = vst [vmem:[#allocation8] sm:$0xff] %v150
    %175 = vst [vmem:[#allocation8 + $0x8] sm:$0xff] %v151
    %176 = vst [vmem:[#allocation8 + $0x10] sm:$0xff] %v152
    %177 = vst [vmem:[#allocation8 + $0x18] sm:$0xff] %v153
    %178 = vst [vmem:[#allocation8 + $0x20] sm:$0xff] %v154
    %179 = vst [vmem:[#allocation8 + $0x28] sm:$0xff] %v155
    %180 = vst [vmem:[#allocation8 + $0x30] sm:$0xff] %v156
    %181 = vst [vmem:[#allocation8 + $0x38] sm:$0xff] %v157
    %182 = vst [vmem:[#allocation8 + $0x40] sm:$0xff] %v158
    %183 = vst [vmem:[#allocation8 + $0x48] sm:$0xff] %v159
    %184 = vst [vmem:[#allocation8 + $0x50] sm:$0xff] %v160
    %185 = vst [vmem:[#allocation8 + $0x58] sm:$0xff] %v161
    %186 = vst [vmem:[#allocation8 + $0x60] sm:$0xff] %v162
    %187 = vst [vmem:[#allocation8 + $0x68] sm:$0xff] %v163
    %188 = vst [vmem:[#allocation8 + $0x70] sm:$0xff] %v164
    %189 = vst [vmem:[#allocation8 + $0x78] sm:$0xff] %v165
    %190 = vst [vmem:[#allocation8 + $0x80] sm:$0xff] %v166
    %191 = vst [vmem:[#allocation8 + $0x88] sm:$0xff] %v167
    %192 = vst [vmem:[#allocation8 + $0x90] sm:$0xff] %v168
    %193 = vst [vmem:[#allocation8 + $0x98] sm:$0xff] %v169
    %194 = vst [vmem:[#allocation8 + $0xa0] sm:$0xff] %v170
    %195 = vst [vmem:[#allocation8 + $0xa8] sm:$0xff] %v171
    %196 = vst [vmem:[#allocation8 + $0xb0] sm:$0xff] %v172
    %197 = vst [vmem:[#allocation8 + $0xb8] sm:$0xff] %v173
    // Predicated region
    $region22: #{tpu_custom_call.1} parent=1 // pred_check
      _
    $region23: #{tpu_custom_call.1} parent=1 // pred_check_branch
      %199 = sbr.rel (0) target = $region25
    $region24: #{tpu_custom_call.1} parent=1 // pred_region
      %s201 = ssub.s32 3072, 2304
      %202 = vsyncadd [#allocation5], %s201
      %s203 = sshll.u32 [#allocation8], 4
      %s204 = int_to_ptr.vmem [resolvable:$true] %s203
      %209 = dma.vmem_to_hbm [thread:$0]  %s204, 2304, %s3, [#allocation5], 384, 384, 24
    $region25: #{tpu_custom_call.1} parent=1 // pred_fallthru
      _
    // Predicated region
    $region26: #{tpu_custom_call.1} parent=1 // pred_check
      _
    $region27: #{tpu_custom_call.1} parent=1 // pred_check_branch
      %211 = sbr.rel (0) target = $region29
    $region28: #{tpu_custom_call.1} parent=1 // pred_region
      %212 = dma.done [#allocation5], 3072
    $region29: #{tpu_custom_call.1} parent=1 // pred_fallthru
      _
    %213 = vsyncpa [#allocation4], 1
    %214 = vsyncpa [#allocation7], 1
    %215 = vsyncpa [#allocation5], 1

</llo_original>
